<compile_context>
chip_gen: v6e
topology: v6e:2x2x1
jax: 0.10.0
libtpu: 0.0.40
codegen_flags: <defaults>
</compile_context>

<pallas_src>
import functools

import jax
import jax.numpy as jnp
import numpy as np
from jax import lax
from jax.experimental import pallas as pl
from jax.experimental.pallas import tpu as pltpu

STATE_DIM = 6
LANES = 128


def _quad6d_kernel(state_ref, control_ref, out_ref, *, dt, chunk):
    # Block shapes are (6, rb, 128): state dim x sublane-rows x lanes.
    rows = state_ref.shape[1]
    nchunks = rows // chunk

    def body(c, carry):
        r = pl.multiple_of(c * chunk, chunk)
        sl = pl.ds(r, chunk)

        x     = state_ref[0, sl, :]
        y     = state_ref[1, sl, :]
        z     = state_ref[2, sl, :]
        phi   = state_ref[3, sl, :]
        theta = state_ref[4, sl, :]
        psi   = state_ref[5, sl, :]

        u1 = control_ref[0, sl, :]
        u2 = control_ref[1, sl, :]
        u3 = control_ref[2, sl, :]
        u4 = control_ref[3, sl, :]
        u5 = control_ref[4, sl, :]
        u6 = control_ref[5, sl, :]

        cphi,   sphi   = jnp.cos(phi),   jnp.sin(phi)
        ctheta, stheta = jnp.cos(theta), jnp.sin(theta)
        cpsi,   spsi   = jnp.cos(psi),   jnp.sin(psi)

        # One exact reciprocal feeds both sec(theta) and tan(theta).
        inv_ct   = 1.0 / ctheta
        sphi_st  = sphi * stheta
        cphi_st  = cphi * stheta
        sphi_sec = sphi * inv_ct          # sphi / cos(theta)
        cphi_sec = cphi * inv_ct          # cphi / cos(theta)
        tt_sphi  = sphi_st * inv_ct       # sphi * tan(theta)
        tt_cphi  = cphi_st * inv_ct       # cphi * tan(theta)

        # f @ control expanded row by row (rows of f have at most 3 non-zeros).
        dx = (ctheta * cpsi) * u1 \
           + (cpsi * sphi_st - cphi * spsi) * u2 \
           + (spsi * sphi + cpsi * cphi_st) * u3
        dy = (ctheta * spsi) * u1 \
           + (cphi * cpsi + spsi * sphi_st) * u2 \
           + (spsi * cphi_st - cpsi * sphi) * u3
        dz     = (-stheta) * u1 + (ctheta * sphi) * u2 + (cphi * ctheta) * u3
        dphi   = u4 + tt_sphi * u5 + tt_cphi * u6
        dtheta = cphi * u5 - sphi * u6
        dpsi   = sphi_sec * u5 + cphi_sec * u6

        # Six dense (chunk, 128) full-lane-width stores.
        out_ref[0, sl, :] = x     + dt * dx
        out_ref[1, sl, :] = y     + dt * dy
        out_ref[2, sl, :] = z     + dt * dz
        out_ref[3, sl, :] = phi   + dt * dphi
        out_ref[4, sl, :] = theta + dt * dtheta
        out_ref[5, sl, :] = psi   + dt * dpsi
        return carry

    lax.fori_loop(0, nchunks, body, 0, unroll=(nchunks <= 8))


def quadcopter6d_step_lane_major(state_lm, control_lm, dt, *, row_block=512, chunk=8):
    """Single Euler step on lane-major inputs of shape (6, R, 128).

    This is the zero-copy API: feed step N's output straight into step N+1
    (no transposes, pads, or slices between calls).
    """
    D, R, L = state_lm.shape
    assert D == STATE_DIM and L == LANES
    assert control_lm.shape == state_lm.shape
    assert R % chunk == 0, "R (=padded_batch/128) must be a multiple of `chunk`"

    # Largest row-block that is a multiple of `chunk` and divides R.
    rb = min(row_block, R)
    rb -= rb % chunk
    while R % rb != 0:
        rb -= chunk
    grid = (R // rb,)

    kernel = functools.partial(_quad6d_kernel, dt=float(dt), chunk=chunk)

    return pl.pallas_call(
        kernel,
        out_shape=jax.ShapeDtypeStruct((STATE_DIM, R, LANES), state_lm.dtype),
        grid_spec=pltpu.PrefetchScalarGridSpec(
            num_scalar_prefetch=0,
            grid=grid,
            in_specs=[
                pl.BlockSpec((STATE_DIM, rb, LANES), lambda i: (0, i, 0)),
                pl.BlockSpec((STATE_DIM, rb, LANES), lambda i: (0, i, 0)),
            ],
            out_specs=pl.BlockSpec((STATE_DIM, rb, LANES), lambda i: (0, i, 0)),
        ),
        compiler_params=pltpu.CompilerParams(
            dimension_semantics=("parallel",)),
    )(state_lm, control_lm)


def quadcopter6d_step(state, control, dt, *, row_block=512, chunk=8):
    """(B, 6) compatibility wrapper matching Quadcopter6DDynamics(dt).forward.

    Does the (B,6) <-> (6, R, 128) layout plumbing exactly once.  For rollouts
    use quadcopter6d_step_lane_major directly and skip these copies.
    """
    B, D = state.shape
    assert D == STATE_DIM and control.shape == (B, STATE_DIM)

    pad_to = LANES * chunk               # 1024: keeps R a multiple of `chunk`
    padded = ((B + pad_to - 1) // pad_to) * pad_to

    s_t = state.T                        # (6, B)
    c_t = control.T
    if padded != B:
        pad = padded - B
        s_t = jnp.pad(s_t, ((0, 0), (0, pad)))
        c_t = jnp.pad(c_t, ((0, 0), (0, pad)))

    R = padded // LANES
    s_lm = s_t.reshape(STATE_DIM, R, LANES)
    c_lm = c_t.reshape(STATE_DIM, R, LANES)

    out_lm = quadcopter6d_step_lane_major(
        s_lm, c_lm, dt, row_block=row_block, chunk=chunk)

    return out_lm.reshape(STATE_DIM, padded)[:, :B].T


def _reference(state, control, dt):
    """Pure-JAX reference mirroring the PyTorch module exactly."""
    x, y, z, phi, theta, psi = jnp.split(state, 6, axis=-1)
    cphi, sphi = jnp.cos(phi), jnp.sin(phi)
    ctheta, stheta = jnp.cos(theta), jnp.sin(theta)
    cpsi, spsi = jnp.cos(psi), jnp.sin(psi)
    ttheta = jnp.tan(theta)
    zeros = jnp.zeros_like(x)
    ones = jnp.ones_like(x)
    f1 = jnp.concatenate((ctheta * cpsi, -cphi * spsi + cpsi * sphi * stheta,
                          spsi * sphi + cphi * cpsi * stheta, zeros, zeros, zeros), axis=1)
    f2 = jnp.concatenate([ctheta * spsi, cphi * cpsi + sphi * spsi * stheta,
                          -cpsi * sphi + cphi * spsi * stheta, zeros, zeros, zeros], axis=1)
    f3 = jnp.concatenate([-stheta, ctheta * sphi, cphi * ctheta, zeros, zeros, zeros], axis=1)
    f4 = jnp.concatenate([zeros, zeros, zeros, ones, sphi * ttheta, cphi * ttheta], axis=1)
    f5 = jnp.concatenate([zeros, zeros, zeros, zeros, cphi, -sphi], axis=1)
    f6 = jnp.concatenate([zeros, zeros, zeros, zeros, sphi / ctheta, cphi / ctheta], axis=1)
    f = jnp.stack((f1, f2, f3, f4, f5, f6), axis=-2)
    nxt = state[..., None] + f @ control[..., None] * dt
    return nxt[..., 0]


if __name__ == "__main__":
    dt = 0.05
    key = jax.random.PRNGKey(0)
    k1, k2 = jax.random.split(key)

    # Case 1: small, non-multiple-of-128 batch (exercises the padding path).
    B1 = 1000
    state1 = jax.random.uniform(k1, (B1, STATE_DIM), jnp.float32, -1.0, 1.0)
    control1 = jax.random.uniform(k2, (B1, STATE_DIM), jnp.float32, -1.0, 1.0)
    out1 = jax.block_until_ready(quadcopter6d_step(state1, control1, dt))
    ref1 = _reference(state1, control1, dt)
    if not np.allclose(np.asarray(out1), np.asarray(ref1), rtol=1e-5, atol=1e-5):
        raise AssertionError("Pallas kernel output mismatch vs reference (case 1)")

    # Case 2: multi-block grid + multi-chunk inner loop.
    B2 = 8192
    k3, k4 = jax.random.split(k2)
    state2 = jax.random.uniform(k3, (B2, STATE_DIM), jnp.float32, -1.0, 1.0)
    control2 = jax.random.uniform(k4, (B2, STATE_DIM), jnp.float32, -1.0, 1.0)
    out2 = jax.block_until_ready(
        quadcopter6d_step(state2, control2, dt, row_block=32))
    ref2 = _reference(state2, control2, dt)
    if not np.allclose(np.asarray(out2), np.asarray(ref2), rtol=1e-5, atol=1e-5):
        raise AssertionError("Pallas kernel output mismatch vs reference (case 2)")

    print("KERNEL_OK")
</pallas_src>

<mosaic_0001>
module attributes {stable_mosaic.version = 11 : i64} {
  func.func @_quad6d_kernel(%arg0: i32, %arg1: memref<6x8x128xf32, #tpu.memory_space<vmem>>, %arg2: memref<6x8x128xf32, #tpu.memory_space<vmem>>, %arg3: memref<6x8x128xf32, #tpu.memory_space<vmem>>) attributes {dimension_semantics = [#tpu.dimension_semantics<parallel>], iteration_bounds = array<i64: 1>, scalar_prefetch = 0 : i64, scratch_operands = 0 : i64, tpu.core_type = #tpu.core_type<tc>, window_params = [{transform_indices = @transform_0, window_bounds = array<i64: 6, 8, 128>}, {transform_indices = @transform_1, window_bounds = array<i64: 6, 8, 128>}, {transform_indices = @transform_2, window_bounds = array<i64: 6, 8, 128>}]} {
    %c0_i32 = arith.constant 0 : i32
    %c8_i32 = arith.constant 8 : i32
    %0 = arith.muli %c0_i32, %c8_i32 : i32
    %1 = tpu.assume_multiple %0, 8 : i32
    %c0 = arith.constant 0 : index
    %2 = arith.index_cast %1 : i32 to index
    %c0_0 = arith.constant 0 : index
    %3 = vector.load %arg1[%c0, %2, %c0_0] : memref<6x8x128xf32, #tpu.memory_space<vmem>>, vector<1x8x128xf32>
    %4 = vector.shape_cast %3 : vector<1x8x128xf32> to vector<8x128xf32>
    %c1 = arith.constant 1 : index
    %5 = arith.index_cast %1 : i32 to index
    %c0_1 = arith.constant 0 : index
    %6 = vector.load %arg1[%c1, %5, %c0_1] : memref<6x8x128xf32, #tpu.memory_space<vmem>>, vector<1x8x128xf32>
    %7 = vector.shape_cast %6 : vector<1x8x128xf32> to vector<8x128xf32>
    %c2 = arith.constant 2 : index
    %8 = arith.index_cast %1 : i32 to index
    %c0_2 = arith.constant 0 : index
    %9 = vector.load %arg1[%c2, %8, %c0_2] : memref<6x8x128xf32, #tpu.memory_space<vmem>>, vector<1x8x128xf32>
    %10 = vector.shape_cast %9 : vector<1x8x128xf32> to vector<8x128xf32>
    %c3 = arith.constant 3 : index
    %11 = arith.index_cast %1 : i32 to index
    %c0_3 = arith.constant 0 : index
    %12 = vector.load %arg1[%c3, %11, %c0_3] : memref<6x8x128xf32, #tpu.memory_space<vmem>>, vector<1x8x128xf32>
    %13 = vector.shape_cast %12 : vector<1x8x128xf32> to vector<8x128xf32>
    %c4 = arith.constant 4 : index
    %14 = arith.index_cast %1 : i32 to index
    %c0_4 = arith.constant 0 : index
    %15 = vector.load %arg1[%c4, %14, %c0_4] : memref<6x8x128xf32, #tpu.memory_space<vmem>>, vector<1x8x128xf32>
    %16 = vector.shape_cast %15 : vector<1x8x128xf32> to vector<8x128xf32>
    %c5 = arith.constant 5 : index
    %17 = arith.index_cast %1 : i32 to index
    %c0_5 = arith.constant 0 : index
    %18 = vector.load %arg1[%c5, %17, %c0_5] : memref<6x8x128xf32, #tpu.memory_space<vmem>>, vector<1x8x128xf32>
    %19 = vector.shape_cast %18 : vector<1x8x128xf32> to vector<8x128xf32>
    %c0_6 = arith.constant 0 : index
    %20 = arith.index_cast %1 : i32 to index
    %c0_7 = arith.constant 0 : index
    %21 = vector.load %arg2[%c0_6, %20, %c0_7] : memref<6x8x128xf32, #tpu.memory_space<vmem>>, vector<1x8x128xf32>
    %22 = vector.shape_cast %21 : vector<1x8x128xf32> to vector<8x128xf32>
    %c1_8 = arith.constant 1 : index
    %23 = arith.index_cast %1 : i32 to index
    %c0_9 = arith.constant 0 : index
    %24 = vector.load %arg2[%c1_8, %23, %c0_9] : memref<6x8x128xf32, #tpu.memory_space<vmem>>, vector<1x8x128xf32>
    %25 = vector.shape_cast %24 : vector<1x8x128xf32> to vector<8x128xf32>
    %c2_10 = arith.constant 2 : index
    %26 = arith.index_cast %1 : i32 to index
    %c0_11 = arith.constant 0 : index
    %27 = vector.load %arg2[%c2_10, %26, %c0_11] : memref<6x8x128xf32, #tpu.memory_space<vmem>>, vector<1x8x128xf32>
    %28 = vector.shape_cast %27 : vector<1x8x128xf32> to vector<8x128xf32>
    %c3_12 = arith.constant 3 : index
    %29 = arith.index_cast %1 : i32 to index
    %c0_13 = arith.constant 0 : index
    %30 = vector.load %arg2[%c3_12, %29, %c0_13] : memref<6x8x128xf32, #tpu.memory_space<vmem>>, vector<1x8x128xf32>
    %31 = vector.shape_cast %30 : vector<1x8x128xf32> to vector<8x128xf32>
    %c4_14 = arith.constant 4 : index
    %32 = arith.index_cast %1 : i32 to index
    %c0_15 = arith.constant 0 : index
    %33 = vector.load %arg2[%c4_14, %32, %c0_15] : memref<6x8x128xf32, #tpu.memory_space<vmem>>, vector<1x8x128xf32>
    %34 = vector.shape_cast %33 : vector<1x8x128xf32> to vector<8x128xf32>
    %c5_16 = arith.constant 5 : index
    %35 = arith.index_cast %1 : i32 to index
    %c0_17 = arith.constant 0 : index
    %36 = vector.load %arg2[%c5_16, %35, %c0_17] : memref<6x8x128xf32, #tpu.memory_space<vmem>>, vector<1x8x128xf32>
    %37 = vector.shape_cast %36 : vector<1x8x128xf32> to vector<8x128xf32>
    %38 = math.cos %13 : vector<8x128xf32>
    %39 = math.sin %13 : vector<8x128xf32>
    %40 = math.cos %16 : vector<8x128xf32>
    %41 = math.sin %16 : vector<8x128xf32>
    %42 = math.cos %19 : vector<8x128xf32>
    %43 = math.sin %19 : vector<8x128xf32>
    %cst = arith.constant 1.000000e+00 : f32
    %44 = vector.broadcast %cst : f32 to vector<8x128xf32>
    %45 = arith.divf %44, %40 : vector<8x128xf32>
    %46 = arith.mulf %39, %41 : vector<8x128xf32>
    %47 = arith.mulf %38, %41 : vector<8x128xf32>
    %48 = arith.mulf %39, %45 : vector<8x128xf32>
    %49 = arith.mulf %38, %45 : vector<8x128xf32>
    %50 = arith.mulf %46, %45 : vector<8x128xf32>
    %51 = arith.mulf %47, %45 : vector<8x128xf32>
    %52 = arith.mulf %40, %42 : vector<8x128xf32>
    %53 = arith.mulf %52, %22 : vector<8x128xf32>
    %54 = arith.mulf %42, %46 : vector<8x128xf32>
    %55 = arith.mulf %38, %43 : vector<8x128xf32>
    %56 = arith.subf %54, %55 : vector<8x128xf32>
    %57 = arith.mulf %56, %25 : vector<8x128xf32>
    %58 = arith.addf %53, %57 : vector<8x128xf32>
    %59 = arith.mulf %43, %39 : vector<8x128xf32>
    %60 = arith.mulf %42, %47 : vector<8x128xf32>
    %61 = arith.addf %59, %60 : vector<8x128xf32>
    %62 = arith.mulf %61, %28 : vector<8x128xf32>
    %63 = arith.addf %58, %62 : vector<8x128xf32>
    %64 = arith.mulf %40, %43 : vector<8x128xf32>
    %65 = arith.mulf %64, %22 : vector<8x128xf32>
    %66 = arith.mulf %38, %42 : vector<8x128xf32>
    %67 = arith.mulf %43, %46 : vector<8x128xf32>
    %68 = arith.addf %66, %67 : vector<8x128xf32>
    %69 = arith.mulf %68, %25 : vector<8x128xf32>
    %70 = arith.addf %65, %69 : vector<8x128xf32>
    %71 = arith.mulf %43, %47 : vector<8x128xf32>
    %72 = arith.mulf %42, %39 : vector<8x128xf32>
    %73 = arith.subf %71, %72 : vector<8x128xf32>
    %74 = arith.mulf %73, %28 : vector<8x128xf32>
    %75 = arith.addf %70, %74 : vector<8x128xf32>
    %cst_18 = arith.constant 0.000000e+00 : f32
    %76 = vector.broadcast %cst_18 : f32 to vector<8x128xf32>
    %77 = arith.subf %76, %41 : vector<8x128xf32>
    %78 = arith.mulf %77, %22 : vector<8x128xf32>
    %79 = arith.mulf %40, %39 : vector<8x128xf32>
    %80 = arith.mulf %79, %25 : vector<8x128xf32>
    %81 = arith.addf %78, %80 : vector<8x128xf32>
    %82 = arith.mulf %38, %40 : vector<8x128xf32>
    %83 = arith.mulf %82, %28 : vector<8x128xf32>
    %84 = arith.addf %81, %83 : vector<8x128xf32>
    %85 = arith.mulf %50, %34 : vector<8x128xf32>
    %86 = arith.addf %31, %85 : vector<8x128xf32>
    %87 = arith.mulf %51, %37 : vector<8x128xf32>
    %88 = arith.addf %86, %87 : vector<8x128xf32>
    %89 = arith.mulf %38, %34 : vector<8x128xf32>
    %90 = arith.mulf %39, %37 : vector<8x128xf32>
    %91 = arith.subf %89, %90 : vector<8x128xf32>
    %92 = arith.mulf %48, %34 : vector<8x128xf32>
    %93 = arith.mulf %49, %37 : vector<8x128xf32>
    %94 = arith.addf %92, %93 : vector<8x128xf32>
    %cst_19 = arith.constant 5.000000e-02 : f32
    %95 = vector.broadcast %cst_19 : f32 to vector<8x128xf32>
    %96 = arith.mulf %95, %63 : vector<8x128xf32>
    %97 = arith.addf %4, %96 : vector<8x128xf32>
    %c0_20 = arith.constant 0 : index
    %98 = arith.index_cast %1 : i32 to index
    %c0_21 = arith.constant 0 : index
    %99 = vector.load %arg3[%c0_20, %98, %c0_21] : memref<6x8x128xf32, #tpu.memory_space<vmem>>, vector<1x8x128xf32>
    %100 = vector.shape_cast %99 : vector<1x8x128xf32> to vector<8x128xf32>
    %101 = vector.shape_cast %97 : vector<8x128xf32> to vector<1x8x128xf32>
    tpu.vector_store %arg3[%c0_20, %98, %c0_21], %101 {strides = array<i32>} : memref<6x8x128xf32, #tpu.memory_space<vmem>>, vector<1x8x128xf32>,
    %cst_22 = arith.constant 5.000000e-02 : f32
    %102 = vector.broadcast %cst_22 : f32 to vector<8x128xf32>
    %103 = arith.mulf %102, %75 : vector<8x128xf32>
    %104 = arith.addf %7, %103 : vector<8x128xf32>
    %c1_23 = arith.constant 1 : index
    %105 = arith.index_cast %1 : i32 to index
    %c0_24 = arith.constant 0 : index
    %106 = vector.load %arg3[%c1_23, %105, %c0_24] : memref<6x8x128xf32, #tpu.memory_space<vmem>>, vector<1x8x128xf32>
    %107 = vector.shape_cast %106 : vector<1x8x128xf32> to vector<8x128xf32>
    %108 = vector.shape_cast %104 : vector<8x128xf32> to vector<1x8x128xf32>
    tpu.vector_store %arg3[%c1_23, %105, %c0_24], %108 {strides = array<i32>} : memref<6x8x128xf32, #tpu.memory_space<vmem>>, vector<1x8x128xf32>,
    %cst_25 = arith.constant 5.000000e-02 : f32
    %109 = vector.broadcast %cst_25 : f32 to vector<8x128xf32>
    %110 = arith.mulf %109, %84 : vector<8x128xf32>
    %111 = arith.addf %10, %110 : vector<8x128xf32>
    %c2_26 = arith.constant 2 : index
    %112 = arith.index_cast %1 : i32 to index
    %c0_27 = arith.constant 0 : index
    %113 = vector.load %arg3[%c2_26, %112, %c0_27] : memref<6x8x128xf32, #tpu.memory_space<vmem>>, vector<1x8x128xf32>
    %114 = vector.shape_cast %113 : vector<1x8x128xf32> to vector<8x128xf32>
    %115 = vector.shape_cast %111 : vector<8x128xf32> to vector<1x8x128xf32>
    tpu.vector_store %arg3[%c2_26, %112, %c0_27], %115 {strides = array<i32>} : memref<6x8x128xf32, #tpu.memory_space<vmem>>, vector<1x8x128xf32>,
    %cst_28 = arith.constant 5.000000e-02 : f32
    %116 = vector.broadcast %cst_28 : f32 to vector<8x128xf32>
    %117 = arith.mulf %116, %88 : vector<8x128xf32>
    %118 = arith.addf %13, %117 : vector<8x128xf32>
    %c3_29 = arith.constant 3 : index
    %119 = arith.index_cast %1 : i32 to index
    %c0_30 = arith.constant 0 : index
    %120 = vector.load %arg3[%c3_29, %119, %c0_30] : memref<6x8x128xf32, #tpu.memory_space<vmem>>, vector<1x8x128xf32>
    %121 = vector.shape_cast %120 : vector<1x8x128xf32> to vector<8x128xf32>
    %122 = vector.shape_cast %118 : vector<8x128xf32> to vector<1x8x128xf32>
    tpu.vector_store %arg3[%c3_29, %119, %c0_30], %122 {strides = array<i32>} : memref<6x8x128xf32, #tpu.memory_space<vmem>>, vector<1x8x128xf32>,
    %cst_31 = arith.constant 5.000000e-02 : f32
    %123 = vector.broadcast %cst_31 : f32 to vector<8x128xf32>
    %124 = arith.mulf %123, %91 : vector<8x128xf32>
    %125 = arith.addf %16, %124 : vector<8x128xf32>
    %c4_32 = arith.constant 4 : index
    %126 = arith.index_cast %1 : i32 to index
    %c0_33 = arith.constant 0 : index
    %127 = vector.load %arg3[%c4_32, %126, %c0_33] : memref<6x8x128xf32, #tpu.memory_space<vmem>>, vector<1x8x128xf32>
    %128 = vector.shape_cast %127 : vector<1x8x128xf32> to vector<8x128xf32>
    %129 = vector.shape_cast %125 : vector<8x128xf32> to vector<1x8x128xf32>
    tpu.vector_store %arg3[%c4_32, %126, %c0_33], %129 {strides = array<i32>} : memref<6x8x128xf32, #tpu.memory_space<vmem>>, vector<1x8x128xf32>,
    %cst_34 = arith.constant 5.000000e-02 : f32
    %130 = vector.broadcast %cst_34 : f32 to vector<8x128xf32>
    %131 = arith.mulf %130, %94 : vector<8x128xf32>
    %132 = arith.addf %19, %131 : vector<8x128xf32>
    %c5_35 = arith.constant 5 : index
    %133 = arith.index_cast %1 : i32 to index
    %c0_36 = arith.constant 0 : index
    %134 = vector.load %arg3[%c5_35, %133, %c0_36] : memref<6x8x128xf32, #tpu.memory_space<vmem>>, vector<1x8x128xf32>
    %135 = vector.shape_cast %134 : vector<1x8x128xf32> to vector<8x128xf32>
    %136 = vector.shape_cast %132 : vector<8x128xf32> to vector<1x8x128xf32>
    tpu.vector_store %arg3[%c5_35, %133, %c0_36], %136 {strides = array<i32>} : memref<6x8x128xf32, #tpu.memory_space<vmem>>, vector<1x8x128xf32>,
    %c1_i32 = arith.constant 1 : i32
    return
  }
  func.func @transform_0(%arg0: i32) -> (i32, i32, i32) {
    %c0_i32 = arith.constant 0 : i32
    %c0_i32_0 = arith.constant 0 : i32
    %c0_i32_1 = arith.constant 0 : i32
    return %c0_i32, %arg0, %c0_i32_0 : i32, i32, i32
  }
  func.func @transform_1(%arg0: i32) -> (i32, i32, i32) {
    %c0_i32 = arith.constant 0 : i32
    %c0_i32_0 = arith.constant 0 : i32
    %c0_i32_1 = arith.constant 0 : i32
    return %c0_i32, %arg0, %c0_i32_0 : i32, i32, i32
  }
  func.func @transform_2(%arg0: i32) -> (i32, i32, i32) {
    %c0_i32 = arith.constant 0 : i32
    %c0_i32_0 = arith.constant 0 : i32
    %c0_i32_1 = arith.constant 0 : i32
    return %c0_i32, %arg0, %c0_i32_0 : i32, i32, i32
  }
}

</mosaic_0001>

<llo_original>
// kernel: tpu_custom_call.1
$region0: #{tpu_custom_call.1}
  #allocation0 [shape = 'u32[]', space=smem, size = 0x4, offset = 0x4, fixed_abs, tag = 'smem constant byte address 0x4 - core index']
  #allocation1 [shape = 'u32[144,128]{1,0:T(1,128)}', space=vmem, size = 0x12000, scoped, tag = 'internal scratch']
  %s0 = inlined_call_operand.hbm [shape: f32[6,8,128], index: 0, kind: input, shape index: {}]
  %s1 = inlined_call_operand.hbm [shape: f32[6,8,128], index: 1, kind: input, shape index: {}]
  %s2 = inlined_call_operand.hbm [shape: f32[6,8,128], index: 2, kind: output, shape index: {}]
  %s3 = sld [smem:[#allocation0]]
  $region26: #{tpu_custom_call.1} parent=0
    _
  %s5 = ssub.s32 1, %s3
  %s6 = scalar_select 0, %s5, %s3
  $region1: #{tpu_custom_call.1} parent=0
    #allocation2 [shape = 'u8[24576]{0}', space=vmem, size = 0x6000, scoped, tag = 'input window, operand 0, single buffered']
    #allocation3 [shape = 's32[1]{0}', space=sflag, size = 0x4, scoped, tag = 'scoped memory for tpu_custom_call.1']
    #allocation4 [shape = 's32[1]{0}', space=sflag, size = 0x4, scoped, tag = 'scoped memory for tpu_custom_call.1']
    #allocation5 [shape = 'u8[24576]{0}', space=vmem, size = 0x6000, scoped, tag = 'input window, operand 1, single buffered']
    #allocation6 [shape = 's32[1]{0}', space=sflag, size = 0x4, scoped, tag = 'scoped memory for tpu_custom_call.1']
    #allocation7 [shape = 'u8[24576]{0}', space=vmem, size = 0x6000, scoped, tag = 'output window, operand 0, single buffered']
    %7 = vsyncpa [#allocation3], 0
    %8 = vsyncpa [#allocation6], 0
    %9 = vsyncpa [#allocation4], 0
    // Predicated region
    $region2: #{tpu_custom_call.1} parent=1 // pred_check
      _
    $region3: #{tpu_custom_call.1} parent=1 // pred_check_branch
      %11 = sbr.rel (0) target = $region5
    $region4: #{tpu_custom_call.1} parent=1 // pred_region
      %s13 = ssub.s32 768, 768
      %14 = vsyncadd [#allocation3], %s13
      %s15 = sshll.u32 [#allocation2], 4
      %s16 = int_to_ptr.vmem [resolvable:$true] %s15
      %21 = dma.hbm_to_vmem [thread:$0]  %s0, 768, %s16, [#allocation3], 128, 128, 8
    $region5: #{tpu_custom_call.1} parent=1 // pred_fallthru
      _
    // Predicated region
    $region6: #{tpu_custom_call.1} parent=1 // pred_check
      _
    $region7: #{tpu_custom_call.1} parent=1 // pred_check_branch
      %23 = sbr.rel (0) target = $region9
    $region8: #{tpu_custom_call.1} parent=1 // pred_region
      %s25 = ssub.s32 768, 768
      %26 = vsyncadd [#allocation6], %s25
      %s27 = sshll.u32 [#allocation5], 4
      %s28 = int_to_ptr.vmem [resolvable:$true] %s27
      %33 = dma.hbm_to_vmem [thread:$0]  %s1, 768, %s28, [#allocation6], 128, 128, 8
    $region9: #{tpu_custom_call.1} parent=1 // pred_fallthru
      _
    // Predicated region
    $region10: #{tpu_custom_call.1} parent=1 // pred_check
      _
    $region11: #{tpu_custom_call.1} parent=1 // pred_check_branch
      %35 = sbr.rel (0) target = $region13
    $region12: #{tpu_custom_call.1} parent=1 // pred_region
      %36 = dma.done [#allocation3], 768
    $region13: #{tpu_custom_call.1} parent=1 // pred_fallthru
      _
    // Predicated region
    $region14: #{tpu_custom_call.1} parent=1 // pred_check
      _
    $region15: #{tpu_custom_call.1} parent=1 // pred_check_branch
      %38 = sbr.rel (0) target = $region17
    $region16: #{tpu_custom_call.1} parent=1 // pred_region
      %39 = dma.done [#allocation6], 768
    $region17: #{tpu_custom_call.1} parent=1 // pred_fallthru
      _
    %v40 = vld [vmem:[#allocation2] sm:$0xff]
    %s41 = sadd.s32 0, 8
    %s42 = scalar_lea.vmem [#allocation2], %s41
    %v43 = vld [vmem:[%s42] sm:$0xff]
    %s44 = sadd.s32 0, 16
    %s45 = scalar_lea.vmem [#allocation2], %s44
    %v46 = vld [vmem:[%s45] sm:$0xff]
    %s47 = sadd.s32 0, 24
    %s48 = scalar_lea.vmem [#allocation2], %s47
    %v49 = vld [vmem:[%s48] sm:$0xff]
    %s50 = sadd.s32 0, 32
    %s51 = scalar_lea.vmem [#allocation2], %s50
    %v52 = vld [vmem:[%s51] sm:$0xff]
    %s53 = sadd.s32 0, 40
    %s54 = scalar_lea.vmem [#allocation2], %s53
    %v55 = vld [vmem:[%s54] sm:$0xff]
    %v56 = vld [vmem:[#allocation5] sm:$0xff]
    %s57 = scalar_lea.vmem [#allocation5], %s41
    %v58 = vld [vmem:[%s57] sm:$0xff]
    %s59 = scalar_lea.vmem [#allocation5], %s44
    %v60 = vld [vmem:[%s59] sm:$0xff]
    %s61 = scalar_lea.vmem [#allocation5], %s47
    %v62 = vld [vmem:[%s61] sm:$0xff]
    %s63 = scalar_lea.vmem [#allocation5], %s50
    %v64 = vld [vmem:[%s63] sm:$0xff]
    %s65 = scalar_lea.vmem [#allocation5], %s53
    %v66 = vld [vmem:[%s65] sm:$0xff]
    %v67 = vand.u32 2147483647, %v49
    %vm68 = vcmp.le.f32.partialorder %v67, 0.7853982
    %vm69 = vcmp.lt.s32.totalorder %v49, 0
    %v70 = vand.u32 %v49, 2139095040
    %v71 = vshrl.u32 %v70, 23
    %v72 = vsub.s32 %v71, 127
    %v73 = vand.u32 2147483647, %v49
    %v74 = vand.u32 %v73, 8388607
    %v75 = vor.u32 %v74, 8388608
    %v76 = vsub.s32 0, %v75
    %v77 = vadd.s32 %v72, 1
    %vm78 = vcmp.gt.s32.totalorder %v77, 0
    %v79 = vsel %vm78, %v77, 0
    %v80 = vshrl.u32 %v79, 5
    %v81 = vand.u32 %v79, 31
    %v82 = vsub.s32 32, %v81
    %v83 = vshrl.u32 683565275, %v82
    %v84 = vshll.u32 683565275, %v81
    %v85 = vshrl.u32 2475754826, %v82
    %v86 = vor.u32 %v84, %v85
    %v87 = vshll.u32 2475754826, %v81
    %v88 = vshrl.u32 2131351028, %v82
    %v89 = vor.u32 %v87, %v88
    %v90 = vshll.u32 2131351028, %v81
    %v91 = vshrl.u32 2102212464, %v82
    %v92 = vor.u32 %v90, %v91
    %v93 = vshll.u32 2102212464, %v81
    %v94 = vshrl.u32 920167782, %v82
    %v95 = vor.u32 %v93, %v94
    %v96 = vshll.u32 920167782, %v81
    %v97 = vshrl.u32 1326507024, %v82
    %v98 = vor.u32 %v96, %v97
    %vm99 = vcmp.lt.s32.totalorder %v80, 1
    %vm100 = vcmp.lt.s32.totalorder %v80, 2
    %vm101 = vcmp.lt.s32.totalorder %v80, 3
    %vm102 = vcmp.lt.s32.totalorder %v80, 4
    %v103 = vsel %vm99, %v83, %v86
    %v104 = vsel %vm102, %v92, 2102212464
    %v105 = vsel %vm101, %v89, %v104
    %v106 = vsel %vm100, %v103, %v105
    %v107 = vsel %vm99, %v86, %v89
    %v108 = vsel %vm102, %v95, 920167782
    %v109 = vsel %vm101, %v92, %v108
    %v110 = vsel %vm100, %v107, %v109
    %v111 = vsel %vm99, %v89, %v92
    %v112 = vsel %vm102, %v98, 1326507024
    %v113 = vsel %vm101, %v95, %v112
    %v114 = vsel %vm100, %v111, %v113
    %v115 = vshll.u32 %v75, 8
    %v116 = vmul.u32.u64.compose %v115, %v114
    %v117 = vextract.low.u32 %v116
    %v118 = vextract.high.u32 %v116
    %v119 = vmul.u32.u64.compose %v115, %v110
    %v120 = vextract.low.u32 %v119
    %v121 = vextract.high.u32 %v119
    %v122 = vmul.u32 %v115, %v106
    %v123 = vadd.s32 %v118, %v120
    %vm124 = vc.u32 %v118, %v120
    %v125 = vadd.s32 %v121, 1
    %v126 = vsel %vm124, %v125, %v121
    %v127 = vadd.s32 %v122, %v126
    %v128 = vadd.s32 %v127, 536870912
    %v129 = vshrl.u32 %v128, 30
    %v130 = vshll.u32 %v129, 30
    %v131 = vsub.s32 %v127, %v130
    %vm132 = vcmp.lt.s32.totalorder %v131, 0
    %v133 = vsub.s32 0, %v131
    %v134 = vsel %vm132, %v133, %v131
    %v135 = vclz %v134
    %v136 = vsub.s32 %v135, 2
    %vm137 = vcmp.gt.s32.totalorder 0, %v136
    %v138 = vsel %vm137, 0, %v136
    %v139 = vsub.s32 32, %v138
    %v140 = vshll.u32 %v131, %v138
    %v141 = vshrl.u32 %v123, %v139
    %v142 = vor.u32 %v140, %v141
    %v143 = vsub.s32 4294967266, %v138
    %v144 = vadd.s32 %v143, 127
    %v145 = vshll.u32 %v144, 23
    %v146 = vor.u32 4788187, %v145
    %v147 = vand.u32 2147483647, %v146
    %v149 = vcvt.s32.f32 %v142
    %v150 = vmul.f32 %v149, %v147
    %v151 = vxor.u32 %v150, 2147483648
    %v152 = vsel %vm69, %v151, %v150
    %v153 = vsub.s32 4, %v129
    %v154 = vsel %vm69, %v153, %v129
    %v155 = vsel %vm68, %v49, %v152
    %v156 = vsel %vm68, 0, %v154
    %v157 = vcosq.f32.pop %v155
    %v158 = vsinq.f32.pop %v155
    %vm159 = vweird.f32 %v49
    %v160 = vand.u32 %v156, 3
    %vm161 = vcmp.lt.s32.totalorder %v160, 2
    %vm162 = vcmp.eq.s32.totalorder %v160, 0
    %v163 = vxor.u32 %v158, 2147483648
    %v164 = vsel %vm162, %v157, %v163
    %vm165 = vcmp.eq.s32.totalorder %v160, 2
    %v166 = vxor.u32 %v157, 2147483648
    %v167 = vsel %vm165, %v166, %v158
    %v168 = vsel %vm161, %v164, %v167
    %v169 = vsel %vm159, nan, %v168
    %v170 = vand.u32 2147483647, %v49
    %vm171 = vcmp.le.f32.partialorder %v170, 0.7853982
    %vm172 = vcmp.lt.s32.totalorder %v49, 0
    %v173 = vand.u32 %v49, 2139095040
    %v174 = vshrl.u32 %v173, 23
    %v175 = vsub.s32 %v174, 127
    %v176 = vand.u32 2147483647, %v49
    %v177 = vand.u32 %v176, 8388607
    %v178 = vor.u32 %v177, 8388608
    %v179 = vsub.s32 0, %v178
    %v180 = vadd.s32 %v175, 1
    %vm181 = vcmp.gt.s32.totalorder %v180, 0
    %v182 = vsel %vm181, %v180, 0
    %v183 = vshrl.u32 %v182, 5
    %v184 = vand.u32 %v182, 31
    %v185 = vsub.s32 32, %v184
    %v186 = vshrl.u32 683565275, %v185
    %v187 = vshll.u32 683565275, %v184
    %v188 = vshrl.u32 2475754826, %v185
    %v189 = vor.u32 %v187, %v188
    %v190 = vshll.u32 2475754826, %v184
    %v191 = vshrl.u32 2131351028, %v185
    %v192 = vor.u32 %v190, %v191
    %v193 = vshll.u32 2131351028, %v184
    %v194 = vshrl.u32 2102212464, %v185
    %v195 = vor.u32 %v193, %v194
    %v196 = vshll.u32 2102212464, %v184
    %v197 = vshrl.u32 920167782, %v185
    %v198 = vor.u32 %v196, %v197
    %v199 = vshll.u32 920167782, %v184
    %v200 = vshrl.u32 1326507024, %v185
    %v201 = vor.u32 %v199, %v200
    %vm202 = vcmp.lt.s32.totalorder %v183, 1
    %vm203 = vcmp.lt.s32.totalorder %v183, 2
    %vm204 = vcmp.lt.s32.totalorder %v183, 3
    %vm205 = vcmp.lt.s32.totalorder %v183, 4
    %v206 = vsel %vm202, %v186, %v189
    %v207 = vsel %vm205, %v195, 2102212464
    %v208 = vsel %vm204, %v192, %v207
    %v209 = vsel %vm203, %v206, %v208
    %v210 = vsel %vm202, %v189, %v192
    %v211 = vsel %vm205, %v198, 920167782
    %v212 = vsel %vm204, %v195, %v211
    %v213 = vsel %vm203, %v210, %v212
    %v214 = vsel %vm202, %v192, %v195
    %v215 = vsel %vm205, %v201, 1326507024
    %v216 = vsel %vm204, %v198, %v215
    %v217 = vsel %vm203, %v214, %v216
    %v218 = vshll.u32 %v178, 8
    %v219 = vmul.u32.u64.compose %v218, %v217
    %v220 = vextract.low.u32 %v219
    %v221 = vextract.high.u32 %v219
    %v222 = vmul.u32.u64.compose %v218, %v213
    %v223 = vextract.low.u32 %v222
    %v224 = vextract.high.u32 %v222
    %v225 = vmul.u32 %v218, %v209
    %v226 = vadd.s32 %v221, %v223
    %vm227 = vc.u32 %v221, %v223
    %v228 = vadd.s32 %v224, 1
    %v229 = vsel %vm227, %v228, %v224
    %v230 = vadd.s32 %v225, %v229
    %v231 = vadd.s32 %v230, 536870912
    %v232 = vshrl.u32 %v231, 30
    %v233 = vshll.u32 %v232, 30
    %v234 = vsub.s32 %v230, %v233
    %vm235 = vcmp.lt.s32.totalorder %v234, 0
    %v236 = vsub.s32 0, %v234
    %v237 = vsel %vm235, %v236, %v234
    %v238 = vclz %v237
    %v239 = vsub.s32 %v238, 2
    %vm240 = vcmp.gt.s32.totalorder 0, %v239
    %v241 = vsel %vm240, 0, %v239
    %v242 = vsub.s32 32, %v241
    %v243 = vshll.u32 %v234, %v241
    %v244 = vshrl.u32 %v226, %v242
    %v245 = vor.u32 %v243, %v244
    %v246 = vsub.s32 4294967266, %v241
    %v247 = vadd.s32 %v246, 127
    %v248 = vshll.u32 %v247, 23
    %v249 = vor.u32 4788187, %v248
    %v250 = vand.u32 2147483647, %v249
    %v252 = vcvt.s32.f32 %v245
    %v253 = vmul.f32 %v252, %v250
    %v254 = vxor.u32 %v253, 2147483648
    %v255 = vsel %vm172, %v254, %v253
    %v256 = vsub.s32 4, %v232
    %v257 = vsel %vm172, %v256, %v232
    %v258 = vsel %vm171, %v49, %v255
    %v259 = vsel %vm171, 0, %v257
    %v260 = vcosq.f32.pop %v258
    %v261 = vsinq.f32.pop %v258
    %vm262 = vweird.f32 %v49
    %v263 = vadd.s32 %v259, 3
    %v264 = vand.u32 %v263, 3
    %vm265 = vcmp.lt.s32.totalorder %v264, 2
    %vm266 = vcmp.eq.s32.totalorder %v264, 0
    %v267 = vxor.u32 %v261, 2147483648
    %v268 = vsel %vm266, %v260, %v267
    %vm269 = vcmp.eq.s32.totalorder %v264, 2
    %v270 = vxor.u32 %v260, 2147483648
    %v271 = vsel %vm269, %v270, %v261
    %v272 = vsel %vm265, %v268, %v271
    %v273 = vsel %vm262, nan, %v272
    %v274 = vand.u32 2147483647, %v52
    %vm275 = vcmp.le.f32.partialorder %v274, 0.7853982
    %vm276 = vcmp.lt.s32.totalorder %v52, 0
    %v277 = vand.u32 %v52, 2139095040
    %v278 = vshrl.u32 %v277, 23
    %v279 = vsub.s32 %v278, 127
    %v280 = vand.u32 2147483647, %v52
    %v281 = vand.u32 %v280, 8388607
    %v282 = vor.u32 %v281, 8388608
    %v283 = vsub.s32 0, %v282
    %v284 = vadd.s32 %v279, 1
    %vm285 = vcmp.gt.s32.totalorder %v284, 0
    %v286 = vsel %vm285, %v284, 0
    %v287 = vshrl.u32 %v286, 5
    %v288 = vand.u32 %v286, 31
    %v289 = vsub.s32 32, %v288
    %v290 = vshrl.u32 683565275, %v289
    %v291 = vshll.u32 683565275, %v288
    %v292 = vshrl.u32 2475754826, %v289
    %v293 = vor.u32 %v291, %v292
    %v294 = vshll.u32 2475754826, %v288
    %v295 = vshrl.u32 2131351028, %v289
    %v296 = vor.u32 %v294, %v295
    %v297 = vshll.u32 2131351028, %v288
    %v298 = vshrl.u32 2102212464, %v289
    %v299 = vor.u32 %v297, %v298
    %v300 = vshll.u32 2102212464, %v288
    %v301 = vshrl.u32 920167782, %v289
    %v302 = vor.u32 %v300, %v301
    %v303 = vshll.u32 920167782, %v288
    %v304 = vshrl.u32 1326507024, %v289
    %v305 = vor.u32 %v303, %v304
    %vm306 = vcmp.lt.s32.totalorder %v287, 1
    %vm307 = vcmp.lt.s32.totalorder %v287, 2
    %vm308 = vcmp.lt.s32.totalorder %v287, 3
    %vm309 = vcmp.lt.s32.totalorder %v287, 4
    %v310 = vsel %vm306, %v290, %v293
    %v311 = vsel %vm309, %v299, 2102212464
    %v312 = vsel %vm308, %v296, %v311
    %v313 = vsel %vm307, %v310, %v312
    %v314 = vsel %vm306, %v293, %v296
    %v315 = vsel %vm309, %v302, 920167782
    %v316 = vsel %vm308, %v299, %v315
    %v317 = vsel %vm307, %v314, %v316
    %v318 = vsel %vm306, %v296, %v299
    %v319 = vsel %vm309, %v305, 1326507024
    %v320 = vsel %vm308, %v302, %v319
    %v321 = vsel %vm307, %v318, %v320
    %v322 = vshll.u32 %v282, 8
    %v323 = vmul.u32.u64.compose %v322, %v321
    %v324 = vextract.low.u32 %v323
    %v325 = vextract.high.u32 %v323
    %v326 = vmul.u32.u64.compose %v322, %v317
    %v327 = vextract.low.u32 %v326
    %v328 = vextract.high.u32 %v326
    %v329 = vmul.u32 %v322, %v313
    %v330 = vadd.s32 %v325, %v327
    %vm331 = vc.u32 %v325, %v327
    %v332 = vadd.s32 %v328, 1
    %v333 = vsel %vm331, %v332, %v328
    %v334 = vadd.s32 %v329, %v333
    %v335 = vadd.s32 %v334, 536870912
    %v336 = vshrl.u32 %v335, 30
    %v337 = vshll.u32 %v336, 30
    %v338 = vsub.s32 %v334, %v337
    %vm339 = vcmp.lt.s32.totalorder %v338, 0
    %v340 = vsub.s32 0, %v338
    %v341 = vsel %vm339, %v340, %v338
    %v342 = vclz %v341
    %v343 = vsub.s32 %v342, 2
    %vm344 = vcmp.gt.s32.totalorder 0, %v343
    %v345 = vsel %vm344, 0, %v343
    %v346 = vsub.s32 32, %v345
    %v347 = vshll.u32 %v338, %v345
    %v348 = vshrl.u32 %v330, %v346
    %v349 = vor.u32 %v347, %v348
    %v350 = vsub.s32 4294967266, %v345
    %v351 = vadd.s32 %v350, 127
    %v352 = vshll.u32 %v351, 23
    %v353 = vor.u32 4788187, %v352
    %v354 = vand.u32 2147483647, %v353
    %v356 = vcvt.s32.f32 %v349
    %v357 = vmul.f32 %v356, %v354
    %v358 = vxor.u32 %v357, 2147483648
    %v359 = vsel %vm276, %v358, %v357
    %v360 = vsub.s32 4, %v336
    %v361 = vsel %vm276, %v360, %v336
    %v362 = vsel %vm275, %v52, %v359
    %v363 = vsel %vm275, 0, %v361
    %v364 = vcosq.f32.pop %v362
    %v365 = vsinq.f32.pop %v362
    %vm366 = vweird.f32 %v52
    %v367 = vand.u32 %v363, 3
    %vm368 = vcmp.lt.s32.totalorder %v367, 2
    %vm369 = vcmp.eq.s32.totalorder %v367, 0
    %v370 = vxor.u32 %v365, 2147483648
    %v371 = vsel %vm369, %v364, %v370
    %vm372 = vcmp.eq.s32.totalorder %v367, 2
    %v373 = vxor.u32 %v364, 2147483648
    %v374 = vsel %vm372, %v373, %v365
    %v375 = vsel %vm368, %v371, %v374
    %v376 = vsel %vm366, nan, %v375
    %v377 = vand.u32 2147483647, %v52
    %vm378 = vcmp.le.f32.partialorder %v377, 0.7853982
    %vm379 = vcmp.lt.s32.totalorder %v52, 0
    %v380 = vand.u32 %v52, 2139095040
    %v381 = vshrl.u32 %v380, 23
    %v382 = vsub.s32 %v381, 127
    %v383 = vand.u32 2147483647, %v52
    %v384 = vand.u32 %v383, 8388607
    %v385 = vor.u32 %v384, 8388608
    %v386 = vsub.s32 0, %v385
    %v387 = vadd.s32 %v382, 1
    %vm388 = vcmp.gt.s32.totalorder %v387, 0
    %v389 = vsel %vm388, %v387, 0
    %v390 = vshrl.u32 %v389, 5
    %v391 = vand.u32 %v389, 31
    %v392 = vsub.s32 32, %v391
    %v393 = vshrl.u32 683565275, %v392
    %v394 = vshll.u32 683565275, %v391
    %v395 = vshrl.u32 2475754826, %v392
    %v396 = vor.u32 %v394, %v395
    %v397 = vshll.u32 2475754826, %v391
    %v398 = vshrl.u32 2131351028, %v392
    %v399 = vor.u32 %v397, %v398
    %v400 = vshll.u32 2131351028, %v391
    %v401 = vshrl.u32 2102212464, %v392
    %v402 = vor.u32 %v400, %v401
    %v403 = vshll.u32 2102212464, %v391
    %v404 = vshrl.u32 920167782, %v392
    %v405 = vor.u32 %v403, %v404
    %v406 = vshll.u32 920167782, %v391
    %v407 = vshrl.u32 1326507024, %v392
    %v408 = vor.u32 %v406, %v407
    %vm409 = vcmp.lt.s32.totalorder %v390, 1
    %vm410 = vcmp.lt.s32.totalorder %v390, 2
    %vm411 = vcmp.lt.s32.totalorder %v390, 3
    %vm412 = vcmp.lt.s32.totalorder %v390, 4
    %v413 = vsel %vm409, %v393, %v396
    %v414 = vsel %vm412, %v402, 2102212464
    %v415 = vsel %vm411, %v399, %v414
    %v416 = vsel %vm410, %v413, %v415
    %v417 = vsel %vm409, %v396, %v399
    %v418 = vsel %vm412, %v405, 920167782
    %v419 = vsel %vm411, %v402, %v418
    %v420 = vsel %vm410, %v417, %v419
    %v421 = vsel %vm409, %v399, %v402
    %v422 = vsel %vm412, %v408, 1326507024
    %v423 = vsel %vm411, %v405, %v422
    %v424 = vsel %vm410, %v421, %v423
    %v425 = vshll.u32 %v385, 8
    %v426 = vmul.u32.u64.compose %v425, %v424
    %v427 = vextract.low.u32 %v426
    %v428 = vextract.high.u32 %v426
    %v429 = vmul.u32.u64.compose %v425, %v420
    %v430 = vextract.low.u32 %v429
    %v431 = vextract.high.u32 %v429
    %v432 = vmul.u32 %v425, %v416
    %v433 = vadd.s32 %v428, %v430
    %vm434 = vc.u32 %v428, %v430
    %v435 = vadd.s32 %v431, 1
    %v436 = vsel %vm434, %v435, %v431
    %v437 = vadd.s32 %v432, %v436
    %v438 = vadd.s32 %v437, 536870912
    %v439 = vshrl.u32 %v438, 30
    %v440 = vshll.u32 %v439, 30
    %v441 = vsub.s32 %v437, %v440
    %vm442 = vcmp.lt.s32.totalorder %v441, 0
    %v443 = vsub.s32 0, %v441
    %v444 = vsel %vm442, %v443, %v441
    %v445 = vclz %v444
    %v446 = vsub.s32 %v445, 2
    %vm447 = vcmp.gt.s32.totalorder 0, %v446
    %v448 = vsel %vm447, 0, %v446
    %v449 = vsub.s32 32, %v448
    %v450 = vshll.u32 %v441, %v448
    %v451 = vshrl.u32 %v433, %v449
    %v452 = vor.u32 %v450, %v451
    %v453 = vsub.s32 4294967266, %v448
    %v454 = vadd.s32 %v453, 127
    %v455 = vshll.u32 %v454, 23
    %v456 = vor.u32 4788187, %v455
    %v457 = vand.u32 2147483647, %v456
    %v459 = vcvt.s32.f32 %v452
    %v460 = vmul.f32 %v459, %v457
    %v461 = vxor.u32 %v460, 2147483648
    %v462 = vsel %vm379, %v461, %v460
    %v463 = vsub.s32 4, %v439
    %v464 = vsel %vm379, %v463, %v439
    %v465 = vsel %vm378, %v52, %v462
    %v466 = vsel %vm378, 0, %v464
    %v467 = vcosq.f32.pop %v465
    %v468 = vsinq.f32.pop %v465
    %vm469 = vweird.f32 %v52
    %v470 = vadd.s32 %v466, 3
    %v471 = vand.u32 %v470, 3
    %vm472 = vcmp.lt.s32.totalorder %v471, 2
    %vm473 = vcmp.eq.s32.totalorder %v471, 0
    %v474 = vxor.u32 %v468, 2147483648
    %v475 = vsel %vm473, %v467, %v474
    %vm476 = vcmp.eq.s32.totalorder %v471, 2
    %v477 = vxor.u32 %v467, 2147483648
    %v478 = vsel %vm476, %v477, %v468
    %v479 = vsel %vm472, %v475, %v478
    %v480 = vsel %vm469, nan, %v479
    %v481 = vand.u32 2147483647, %v55
    %vm482 = vcmp.le.f32.partialorder %v481, 0.7853982
    %vm483 = vcmp.lt.s32.totalorder %v55, 0
    %v484 = vand.u32 %v55, 2139095040
    %v485 = vshrl.u32 %v484, 23
    %v486 = vsub.s32 %v485, 127
    %v487 = vand.u32 2147483647, %v55
    %v488 = vand.u32 %v487, 8388607
    %v489 = vor.u32 %v488, 8388608
    %v490 = vsub.s32 0, %v489
    %v491 = vadd.s32 %v486, 1
    %vm492 = vcmp.gt.s32.totalorder %v491, 0
    %v493 = vsel %vm492, %v491, 0
    %v494 = vshrl.u32 %v493, 5
    %v495 = vand.u32 %v493, 31
    %v496 = vsub.s32 32, %v495
    %v497 = vshrl.u32 683565275, %v496
    %v498 = vshll.u32 683565275, %v495
    %v499 = vshrl.u32 2475754826, %v496
    %v500 = vor.u32 %v498, %v499
    %v501 = vshll.u32 2475754826, %v495
    %v502 = vshrl.u32 2131351028, %v496
    %v503 = vor.u32 %v501, %v502
    %v504 = vshll.u32 2131351028, %v495
    %v505 = vshrl.u32 2102212464, %v496
    %v506 = vor.u32 %v504, %v505
    %v507 = vshll.u32 2102212464, %v495
    %v508 = vshrl.u32 920167782, %v496
    %v509 = vor.u32 %v507, %v508
    %v510 = vshll.u32 920167782, %v495
    %v511 = vshrl.u32 1326507024, %v496
    %v512 = vor.u32 %v510, %v511
    %vm513 = vcmp.lt.s32.totalorder %v494, 1
    %vm514 = vcmp.lt.s32.totalorder %v494, 2
    %vm515 = vcmp.lt.s32.totalorder %v494, 3
    %vm516 = vcmp.lt.s32.totalorder %v494, 4
    %v517 = vsel %vm513, %v497, %v500
    %v518 = vsel %vm516, %v506, 2102212464
    %v519 = vsel %vm515, %v503, %v518
    %v520 = vsel %vm514, %v517, %v519
    %v521 = vsel %vm513, %v500, %v503
    %v522 = vsel %vm516, %v509, 920167782
    %v523 = vsel %vm515, %v506, %v522
    %v524 = vsel %vm514, %v521, %v523
    %v525 = vsel %vm513, %v503, %v506
    %v526 = vsel %vm516, %v512, 1326507024
    %v527 = vsel %vm515, %v509, %v526
    %v528 = vsel %vm514, %v525, %v527
    %v529 = vshll.u32 %v489, 8
    %v530 = vmul.u32.u64.compose %v529, %v528
    %v531 = vextract.low.u32 %v530
    %v532 = vextract.high.u32 %v530
    %v533 = vmul.u32.u64.compose %v529, %v524
    %v534 = vextract.low.u32 %v533
    %v535 = vextract.high.u32 %v533
    %v536 = vmul.u32 %v529, %v520
    %v537 = vadd.s32 %v532, %v534
    %vm538 = vc.u32 %v532, %v534
    %v539 = vadd.s32 %v535, 1
    %v540 = vsel %vm538, %v539, %v535
    %v541 = vadd.s32 %v536, %v540
    %v542 = vadd.s32 %v541, 536870912
    %v543 = vshrl.u32 %v542, 30
    %v544 = vshll.u32 %v543, 30
    %v545 = vsub.s32 %v541, %v544
    %vm546 = vcmp.lt.s32.totalorder %v545, 0
    %v547 = vsub.s32 0, %v545
    %v548 = vsel %vm546, %v547, %v545
    %v549 = vclz %v548
    %v550 = vsub.s32 %v549, 2
    %vm551 = vcmp.gt.s32.totalorder 0, %v550
    %v552 = vsel %vm551, 0, %v550
    %v553 = vsub.s32 32, %v552
    %v554 = vshll.u32 %v545, %v552
    %v555 = vshrl.u32 %v537, %v553
    %v556 = vor.u32 %v554, %v555
    %v557 = vsub.s32 4294967266, %v552
    %v558 = vadd.s32 %v557, 127
    %v559 = vshll.u32 %v558, 23
    %v560 = vor.u32 4788187, %v559
    %v561 = vand.u32 2147483647, %v560
    %v563 = vcvt.s32.f32 %v556
    %v564 = vmul.f32 %v563, %v561
    %v565 = vxor.u32 %v564, 2147483648
    %v566 = vsel %vm483, %v565, %v564
    %v567 = vsub.s32 4, %v543
    %v568 = vsel %vm483, %v567, %v543
    %v569 = vsel %vm482, %v55, %v566
    %v570 = vsel %vm482, 0, %v568
    %v571 = vcosq.f32.pop %v569
    %v572 = vsinq.f32.pop %v569
    %vm573 = vweird.f32 %v55
    %v574 = vand.u32 %v570, 3
    %vm575 = vcmp.lt.s32.totalorder %v574, 2
    %vm576 = vcmp.eq.s32.totalorder %v574, 0
    %v577 = vxor.u32 %v572, 2147483648
    %v578 = vsel %vm576, %v571, %v577
    %vm579 = vcmp.eq.s32.totalorder %v574, 2
    %v580 = vxor.u32 %v571, 2147483648
    %v581 = vsel %vm579, %v580, %v572
    %v582 = vsel %vm575, %v578, %v581
    %v583 = vsel %vm573, nan, %v582
    %v584 = vand.u32 2147483647, %v55
    %vm585 = vcmp.le.f32.partialorder %v584, 0.7853982
    %vm586 = vcmp.lt.s32.totalorder %v55, 0
    %v587 = vand.u32 %v55, 2139095040
    %v588 = vshrl.u32 %v587, 23
    %v589 = vsub.s32 %v588, 127
    %v590 = vand.u32 2147483647, %v55
    %v591 = vand.u32 %v590, 8388607
    %v592 = vor.u32 %v591, 8388608
    %v593 = vsub.s32 0, %v592
    %v594 = vadd.s32 %v589, 1
    %vm595 = vcmp.gt.s32.totalorder %v594, 0
    %v596 = vsel %vm595, %v594, 0
    %v597 = vshrl.u32 %v596, 5
    %v598 = vand.u32 %v596, 31
    %v599 = vsub.s32 32, %v598
    %v600 = vshrl.u32 683565275, %v599
    %v601 = vshll.u32 683565275, %v598
    %v602 = vshrl.u32 2475754826, %v599
    %v603 = vor.u32 %v601, %v602
    %v604 = vshll.u32 2475754826, %v598
    %v605 = vshrl.u32 2131351028, %v599
    %v606 = vor.u32 %v604, %v605
    %v607 = vshll.u32 2131351028, %v598
    %v608 = vshrl.u32 2102212464, %v599
    %v609 = vor.u32 %v607, %v608
    %v610 = vshll.u32 2102212464, %v598
    %v611 = vshrl.u32 920167782, %v599
    %v612 = vor.u32 %v610, %v611
    %v613 = vshll.u32 920167782, %v598
    %v614 = vshrl.u32 1326507024, %v599
    %v615 = vor.u32 %v613, %v614
    %vm616 = vcmp.lt.s32.totalorder %v597, 1
    %vm617 = vcmp.lt.s32.totalorder %v597, 2
    %vm618 = vcmp.lt.s32.totalorder %v597, 3
    %vm619 = vcmp.lt.s32.totalorder %v597, 4
    %v620 = vsel %vm616, %v600, %v603
    %v621 = vsel %vm619, %v609, 2102212464
    %v622 = vsel %vm618, %v606, %v621
    %v623 = vsel %vm617, %v620, %v622
    %v624 = vsel %vm616, %v603, %v606
    %v625 = vsel %vm619, %v612, 920167782
    %v626 = vsel %vm618, %v609, %v625
    %v627 = vsel %vm617, %v624, %v626
    %v628 = vsel %vm616, %v606, %v609
    %v629 = vsel %vm619, %v615, 1326507024
    %v630 = vsel %vm618, %v612, %v629
    %v631 = vsel %vm617, %v628, %v630
    %v632 = vshll.u32 %v592, 8
    %v633 = vmul.u32.u64.compose %v632, %v631
    %v634 = vextract.low.u32 %v633
    %v635 = vextract.high.u32 %v633
    %v636 = vmul.u32.u64.compose %v632, %v627
    %v637 = vextract.low.u32 %v636
    %v638 = vextract.high.u32 %v636
    %v639 = vmul.u32 %v632, %v623
    %v640 = vadd.s32 %v635, %v637
    %vm641 = vc.u32 %v635, %v637
    %v642 = vadd.s32 %v638, 1
    %v643 = vsel %vm641, %v642, %v638
    %v644 = vadd.s32 %v639, %v643
    %v645 = vadd.s32 %v644, 536870912
    %v646 = vshrl.u32 %v645, 30
    %v647 = vshll.u32 %v646, 30
    %v648 = vsub.s32 %v644, %v647
    %vm649 = vcmp.lt.s32.totalorder %v648, 0
    %v650 = vsub.s32 0, %v648
    %v651 = vsel %vm649, %v650, %v648
    %v652 = vclz %v651
    %v653 = vsub.s32 %v652, 2
    %vm654 = vcmp.gt.s32.totalorder 0, %v653
    %v655 = vsel %vm654, 0, %v653
    %v656 = vsub.s32 32, %v655
    %v657 = vshll.u32 %v648, %v655
    %v658 = vshrl.u32 %v640, %v656
    %v659 = vor.u32 %v657, %v658
    %v660 = vsub.s32 4294967266, %v655
    %v661 = vadd.s32 %v660, 127
    %v662 = vshll.u32 %v661, 23
    %v663 = vor.u32 4788187, %v662
    %v664 = vand.u32 2147483647, %v663
    %v666 = vcvt.s32.f32 %v659
    %v667 = vmul.f32 %v666, %v664
    %v668 = vxor.u32 %v667, 2147483648
    %v669 = vsel %vm586, %v668, %v667
    %v670 = vsub.s32 4, %v646
    %v671 = vsel %vm586, %v670, %v646
    %v672 = vsel %vm585, %v55, %v669
    %v673 = vsel %vm585, 0, %v671
    %v674 = vcosq.f32.pop %v672
    %v675 = vsinq.f32.pop %v672
    %vm676 = vweird.f32 %v55
    %v677 = vadd.s32 %v673, 3
    %v678 = vand.u32 %v677, 3
    %vm679 = vcmp.lt.s32.totalorder %v678, 2
    %vm680 = vcmp.eq.s32.totalorder %v678, 0
    %v681 = vxor.u32 %v675, 2147483648
    %v682 = vsel %vm680, %v674, %v681
    %vm683 = vcmp.eq.s32.totalorder %v678, 2
    %v684 = vxor.u32 %v674, 2147483648
    %v685 = vsel %vm683, %v684, %v675
    %v686 = vsel %vm679, %v682, %v685
    %v687 = vsel %vm676, nan, %v686
    %v688 = vrcp.pop %v376
    %v689 = vmul.f32 1.0, %v688
    %v690 = vmul.f32 %v273, %v480
    %v691 = vmul.f32 %v169, %v480
    %v692 = vmul.f32 %v273, %v689
    %v693 = vmul.f32 %v169, %v689
    %v694 = vmul.f32 %v690, %v689
    %v695 = vmul.f32 %v691, %v689
    %v696 = vmul.f32 %v376, %v583
    %v697 = vmul.f32 %v696, %v56
    %v698 = vmul.f32 %v583, %v690
    %v699 = vmul.f32 %v169, %v687
    %v700 = vsub.f32 %v698, %v699
    %v701 = vmul.f32 %v700, %v58
    %v702 = vadd.f32 %v697, %v701
    %v703 = vmul.f32 %v687, %v273
    %v704 = vmul.f32 %v583, %v691
    %v705 = vadd.f32 %v703, %v704
    %v706 = vmul.f32 %v705, %v60
    %v707 = vadd.f32 %v702, %v706
    %v708 = vmul.f32 %v376, %v687
    %v709 = vmul.f32 %v708, %v56
    %v710 = vmul.f32 %v169, %v583
    %v711 = vmul.f32 %v687, %v690
    %v712 = vadd.f32 %v710, %v711
    %v713 = vmul.f32 %v712, %v58
    %v714 = vadd.f32 %v709, %v713
    %v715 = vmul.f32 %v687, %v691
    %v716 = vmul.f32 %v583, %v273
    %v717 = vsub.f32 %v715, %v716
    %v718 = vmul.f32 %v717, %v60
    %v719 = vadd.f32 %v714, %v718
    %v720 = vsub.f32 0.0, %v480
    %v721 = vmul.f32 %v720, %v56
    %v722 = vmul.f32 %v376, %v273
    %v723 = vmul.f32 %v722, %v58
    %v724 = vadd.f32 %v721, %v723
    %v725 = vmul.f32 %v169, %v376
    %v726 = vmul.f32 %v725, %v60
    %v727 = vadd.f32 %v724, %v726
    %v728 = vmul.f32 %v694, %v64
    %v729 = vadd.f32 %v62, %v728
    %v730 = vmul.f32 %v695, %v66
    %v731 = vadd.f32 %v729, %v730
    %v732 = vmul.f32 %v169, %v64
    %v733 = vmul.f32 %v273, %v66
    %v734 = vsub.f32 %v732, %v733
    %v735 = vmul.f32 %v692, %v64
    %v736 = vmul.f32 %v693, %v66
    %v737 = vadd.f32 %v735, %v736
    %v738 = vmul.f32 %v707, 0.05
    %v739 = vadd.f32 %v40, %v738
    %740 = vst [vmem:[#allocation7] sm:$0xff] %v739
    %v741 = vmul.f32 %v719, 0.05
    %v742 = vadd.f32 %v43, %v741
    %s743 = scalar_lea.vmem [#allocation7], %s41
    %744 = vst [vmem:[%s743] sm:$0xff] %v742
    %v745 = vmul.f32 %v727, 0.05
    %v746 = vadd.f32 %v46, %v745
    %s747 = scalar_lea.vmem [#allocation7], %s44
    %748 = vst [vmem:[%s747] sm:$0xff] %v746
    %v749 = vmul.f32 %v731, 0.05
    %v750 = vadd.f32 %v49, %v749
    %s751 = scalar_lea.vmem [#allocation7], %s47
    %752 = vst [vmem:[%s751] sm:$0xff] %v750
    %v753 = vmul.f32 %v734, 0.05
    %v754 = vadd.f32 %v52, %v753
    %s755 = scalar_lea.vmem [#allocation7], %s50
    %756 = vst [vmem:[%s755] sm:$0xff] %v754
    %v757 = vmul.f32 %v737, 0.05
    %v758 = vadd.f32 %v55, %v757
    %s759 = scalar_lea.vmem [#allocation7], %s53
    %760 = vst [vmem:[%s759] sm:$0xff] %v758
    // Predicated region
    $region18: #{tpu_custom_call.1} parent=1 // pred_check
      _
    $region19: #{tpu_custom_call.1} parent=1 // pred_check_branch
      %762 = sbr.rel (0) target = $region21
    $region20: #{tpu_custom_call.1} parent=1 // pred_region
      %s764 = ssub.s32 768, 768
      %765 = vsyncadd [#allocation4], %s764
      %s766 = sshll.u32 [#allocation7], 4
      %s767 = int_to_ptr.vmem [resolvable:$true] %s766
      %772 = dma.vmem_to_hbm [thread:$0]  %s767, 768, %s2, [#allocation4], 128, 128, 8
    $region21: #{tpu_custom_call.1} parent=1 // pred_fallthru
      _
    // Predicated region
    $region22: #{tpu_custom_call.1} parent=1 // pred_check
      _
    $region23: #{tpu_custom_call.1} parent=1 // pred_check_branch
      %774 = sbr.rel (0) target = $region25
    $region24: #{tpu_custom_call.1} parent=1 // pred_region
      %775 = dma.done [#allocation4], 768
    $region25: #{tpu_custom_call.1} parent=1 // pred_fallthru
      _
    %776 = vsyncpa [#allocation3], 1
    %777 = vsyncpa [#allocation6], 1
    %778 = vsyncpa [#allocation4], 1

</llo_original>
